<compile_context>
chip_gen: v7x
topology: tpu7x:2x2x1
jax: 0.10.0
libtpu: 0.0.40
codegen_flags: <defaults>
</compile_context>

<pallas_src>
import functools

import jax
import jax.numpy as jnp
from jax.experimental import pallas as pl
from jax.experimental.pallas import tpu as pltpu

# Problem sizes (small, consistent with a 1-D audio conv stack).
B = 2                      # batch
H = 16                     # hidden channels
K = 3                      # conv kernel size ('same' padding)
NBITS = 8                  # message bits
PAD = (K - 1) // 2
N_CONV_LAYERS = 4          # enc conv1, enc conv2, dec conv1, dec conv2
HALO = N_CONV_LAYERS * PAD # 4-frame halo per side = total receptive field
TILE_T = 120               # output frames per grid step (window = 128 lanes)
T = 240                    # demo frames (multiple of TILE_T)
ALPHA = 1.0


def audioseal_kernel(x_ref, msg_ref, w1_ref, b1_ref, w2_ref, w3_ref, b3_ref,
                     w4_ref, b4_ref, out_ref, *, halo, tile_t, total_t, alpha):
  """One batch element x one time tile.  Window = tile_t + 2*halo frames."""
  x = x_ref[0, 0]                                     # (1, W) haloed window
  w = x.shape[-1]

  # Global frame index of every window lane.  Conv1d applies zero padding at
  # every layer, so the t-1 / t+1 taps must be zeroed at the true sequence
  # boundaries (global t == 0 / t == T-1) on every layer, not just the input.
  gpos = (pl.program_id(1) * tile_t - halo
          + jax.lax.broadcasted_iota(jnp.int32, (1, w), 1))
  not_first = (gpos != 0).astype(jnp.float32)
  not_last = (gpos != total_t - 1).astype(jnp.float32)

  def tap_prev(h):   # out[:, t] = h[:, t-1]; zero at window edge & global t==0
    shifted = jnp.concatenate([jnp.zeros_like(h[:, :1]), h[:, :-1]], axis=1)
    return shifted * not_first

  def tap_next(h):   # out[:, t] = h[:, t+1]; zero at window edge & global t==T-1
    shifted = jnp.concatenate([h[:, 1:], jnp.zeros_like(h[:, :1])], axis=1)
    return shifted * not_last

  def conv_hh(wk_ref, h):
    # K=3 'same' conv H->H as three (H,H)@(H,W) MXU matmuls -- no (K*H, W)
    # concatenated RHS buffer.  (On v6e/v7x these operands could be cast to
    # bf16 with f32 accumulation; kept f32 here to hold the 1e-4 parity check.)
    return (jnp.dot(wk_ref[0], tap_prev(h), preferred_element_type=jnp.float32)
            + jnp.dot(wk_ref[1], h, preferred_element_type=jnp.float32)
            + jnp.dot(wk_ref[2], tap_next(h), preferred_element_type=jnp.float32))

  # ---- encoder conv1: 1 -> H channels (three VPU broadcast taps), ReLU ----
  h = (w1_ref[:, 0:1] * tap_prev(x)
       + w1_ref[:, 1:2] * x
       + w1_ref[:, 2:3] * tap_next(x)) + b1_ref[...]
  h = jnp.maximum(h, 0.0)                             # (H, W)

  # ---- encoder conv2 (H -> H) + message processor ----
  # msg_ref already folds in the conv-2 bias: single per-batch (H,1) add.
  h = conv_hh(w2_ref, h) + msg_ref[0]

  # ---- decoder conv1: H -> H, ReLU ----
  h = jnp.maximum(conv_hh(w3_ref, h) + b3_ref[...], 0.0)

  # ---- decoder conv2: H -> 1 watermark (VPU taps + sublane reduce) ----
  wm = (w4_ref[:, 0:1] * tap_prev(h)
        + w4_ref[:, 1:2] * h
        + w4_ref[:, 2:3] * tap_next(h))               # (H, W)
  wm = jnp.sum(wm, axis=0, keepdims=True) + b4_ref[...]   # (1, W)

  # ---- residual on the valid (non-halo) center of the window ----
  x_c = x[:, halo:halo + tile_t]
  wm_c = wm[:, halo:halo + tile_t]
  if alpha == 1.0:                                    # alpha folded at trace time
    out_ref[0, 0] = x_c + wm_c
  else:
    out_ref[0, 0] = x_c + alpha * wm_c


def prepare_weights(params):
  """One-time repack of the Conv1d weights into kernel-friendly layouts."""
  w1, b1, w2, b2, emb, w3, b3, w4, b4 = params
  w1k = w1[:, 0, :]                       # (H, K)  taps of the 1->H conv
  b1c = b1[:, None]                       # (H, 1)
  w2s = jnp.transpose(w2, (2, 0, 1))      # (K, H, H): w2s[k, co, ci] = w2[co, ci, k]
  w3s = jnp.transpose(w3, (2, 0, 1))      # (K, H, H)
  b3c = b3[:, None]                       # (H, 1)
  w4k = w4[0]                             # (H, K)  taps of the H->1 conv
  b4c = b4[:, None]                       # (1, 1)
  return (w1k, b1c, w2s, w3s, b3c, w4k, b4c), (emb, b2)


def prepare_message_bias(emb, b2, msg):
  """Per-batch (H,) bias = summed bit embeddings + conv-2 bias (folded)."""
  idx = 2 * jnp.arange(NBITS, dtype=msg.dtype)[None, :] + msg     # (B, NBITS)
  return emb[idx].sum(axis=1) + b2[None, :]                       # (B, H)


def audioseal_forward(x, msg_bias, weights, alpha=ALPHA, tile_t=TILE_T):
  """x: (B, T) float32 audio.  msg_bias: (B, H) from prepare_message_bias."""
  w1k, b1c, w2s, w3s, b3c, w4k, b4c = weights
  bsz, t_len = x.shape
  assert t_len % tile_t == 0, "pad T to a multiple of the time tile"
  nt = t_len // tile_t
  win = tile_t + 2 * HALO

  # Haloed, tile-aligned windows of the input: (B, NT, 1, W).  The 2*HALO/W
  # duplication (~6%) buys non-overlapping, fully pipelined output blocks.
  x_pad = jnp.pad(x, ((0, 0), (HALO, HALO)))
  idx = jnp.arange(nt)[:, None] * tile_t + jnp.arange(win)[None, :]
  x_win = x_pad[:, idx].reshape(bsz, nt, 1, win)
  msgb = msg_bias.reshape(bsz, H, 1)

  kernel = functools.partial(audioseal_kernel, halo=HALO, tile_t=tile_t,
                             total_t=t_len, alpha=alpha)
  resident = pl.BlockSpec(memory_space=pltpu.MemorySpace.VMEM)  # weights stay put
  # Note: at B >= 8 the output should be presented as a (B, T) sublane-dense
  # slab instead of per-(batch,tile) rows; negligible at B == 2.
  out = pl.pallas_call(
      kernel,
      grid=(bsz, nt),
      in_specs=[
          pl.BlockSpec((1, 1, 1, win), lambda b, i: (b, i, 0, 0)),   # x window
          pl.BlockSpec((1, H, 1), lambda b, i: (b, 0, 0)),           # msg+b2 bias
          resident, resident, resident, resident, resident, resident, resident,
      ],
      out_specs=pl.BlockSpec((1, 1, 1, tile_t), lambda b, i: (b, i, 0, 0)),
      out_shape=jax.ShapeDtypeStruct((bsz, nt, 1, tile_t), jnp.float32),
      compiler_params=pltpu.CompilerParams(
          dimension_semantics=("parallel", "parallel"),
          vmem_limit_bytes=32 * 1024 * 1024),
  )(x_win, msgb, w1k, b1c, w2s, w3s, b3c, w4k, b4c)
  return out.reshape(bsz, t_len)


def audioseal_reference(x, msg, params, alpha=ALPHA):
  """Pure-JAX reference matching PyTorch NCW Conv1d semantics."""
  w1, b1, w2, b2, emb, w3, b3, w4, b4 = params

  def conv1d(h, w, b):
    y = jax.lax.conv_general_dilated(
        h, w, window_strides=(1,), padding=[(PAD, K - 1 - PAD)],
        dimension_numbers=('NCH', 'OIH', 'NCH'))
    return y + b[None, :, None]

  h = x[:, None, :]                                    # (B, 1, T)
  h = jax.nn.relu(conv1d(h, w1, b1))                   # encoder
  h = conv1d(h, w2, b2)
  idx = 2 * jnp.arange(NBITS, dtype=msg.dtype)[None, :] + msg
  h = h + emb[idx].sum(axis=1)[..., None]              # msg_processor
  h = jax.nn.relu(conv1d(h, w3, b3))                   # decoder
  wm = conv1d(h, w4, b4)[:, 0, :]
  return x + alpha * wm                                # watermark[..., :length] is identity here


if __name__ == "__main__":
  key = jax.random.PRNGKey(0)
  ks = jax.random.split(key, 11)
  s = 0.1
  params = (
      jax.random.normal(ks[0], (H, 1, K), jnp.float32) * s,       # encoder conv1 weight
      jax.random.normal(ks[1], (H,), jnp.float32) * s,            # encoder conv1 bias
      jax.random.normal(ks[2], (H, H, K), jnp.float32) * s,       # encoder conv2 weight
      jax.random.normal(ks[3], (H,), jnp.float32) * s,            # encoder conv2 bias
      jax.random.normal(ks[4], (2 * NBITS, H), jnp.float32) * s,  # msg embedding table
      jax.random.normal(ks[5], (H, H, K), jnp.float32) * s,       # decoder conv1 weight
      jax.random.normal(ks[6], (H,), jnp.float32) * s,            # decoder conv1 bias
      jax.random.normal(ks[7], (1, H, K), jnp.float32) * s,       # decoder conv2 weight
      jax.random.normal(ks[8], (1,), jnp.float32) * s,            # decoder conv2 bias
  )
  x = jax.random.normal(ks[9], (B, T), jnp.float32)               # batch x frames
  # message is None -> random {0,1} bits (generated host-side, deterministic)
  msg = jax.random.randint(ks[10], (B, NBITS), 0, 2)

  # TODO(synk): julius.resample_frac path (sample_rate != 16000) has no Pallas
  # equivalent here; we follow the default 16 kHz branch (no resampling).

  weights, (emb, b2) = prepare_weights(params)      # static per model: done once
  msg_bias = prepare_message_bias(emb, b2, msg)     # static per message: done once

  out = audioseal_forward(x, msg_bias, weights, alpha=ALPHA)
  out = jax.block_until_ready(out)

  ref = audioseal_reference(x, msg, params, alpha=ALPHA)
  assert out.shape == x.shape and out.dtype == x.dtype
  assert jnp.allclose(out, ref, atol=1e-4, rtol=1e-4)
  print("KERNEL_OK")
</pallas_src>

<mosaic_0001>
module attributes {stable_mosaic.version = 11 : i64} {
  func.func @audioseal_kernel(%arg0: i32, %arg1: i32, %arg2: memref<1x1x1x128xf32, #tpu.memory_space<vmem>>, %arg3: memref<1x16x1xf32, #tpu.memory_space<vmem>>, %arg4: memref<16x3xf32, #tpu.memory_space<vmem>>, %arg5: memref<16x1xf32, #tpu.memory_space<vmem>>, %arg6: memref<3x16x16xf32, #tpu.memory_space<vmem>>, %arg7: memref<3x16x16xf32, #tpu.memory_space<vmem>>, %arg8: memref<16x1xf32, #tpu.memory_space<vmem>>, %arg9: memref<16x3xf32, #tpu.memory_space<vmem>>, %arg10: memref<1x1xf32, #tpu.memory_space<vmem>>, %arg11: memref<1x1x1x120xf32, #tpu.memory_space<vmem>>) attributes {dimension_semantics = [#tpu.dimension_semantics<parallel>, #tpu.dimension_semantics<parallel>], iteration_bounds = array<i64: 2, 2>, scalar_prefetch = 0 : i64, scratch_operands = 0 : i64, tpu.core_type = #tpu.core_type<tc>, window_params = [{transform_indices = @transform_0, window_bounds = array<i64: 1, 1, 1, 128>}, {transform_indices = @transform_1, window_bounds = array<i64: 1, 16, 1>}, {pipeline_mode = #tpu.pipeline_mode<synchronous>, transform_indices = @transform_2, window_bounds = array<i64: 16, 3>}, {pipeline_mode = #tpu.pipeline_mode<synchronous>, transform_indices = @transform_3, window_bounds = array<i64: 16, 1>}, {pipeline_mode = #tpu.pipeline_mode<synchronous>, transform_indices = @transform_4, window_bounds = array<i64: 3, 16, 16>}, {pipeline_mode = #tpu.pipeline_mode<synchronous>, transform_indices = @transform_5, window_bounds = array<i64: 3, 16, 16>}, {pipeline_mode = #tpu.pipeline_mode<synchronous>, transform_indices = @transform_6, window_bounds = array<i64: 16, 1>}, {pipeline_mode = #tpu.pipeline_mode<synchronous>, transform_indices = @transform_7, window_bounds = array<i64: 16, 3>}, {pipeline_mode = #tpu.pipeline_mode<synchronous>, transform_indices = @transform_8, window_bounds = array<i64: 1, 1>}, {transform_indices = @transform_9, window_bounds = array<i64: 1, 1, 1, 120>}]} {
    %c0 = arith.constant 0 : index
    %c0_0 = arith.constant 0 : index
    %c0_1 = arith.constant 0 : index
    %c0_2 = arith.constant 0 : index
    %0 = vector.load %arg2[%c0, %c0_0, %c0_1, %c0_2] : memref<1x1x1x128xf32, #tpu.memory_space<vmem>>, vector<1x1x1x128xf32>
    %1 = vector.shape_cast %0 : vector<1x1x1x128xf32> to vector<1x128xf32>
    %c120_i32 = arith.constant 120 : i32
    %2 = arith.muli %arg1, %c120_i32 : i32
    %c4_i32 = arith.constant 4 : i32
    %3 = arith.subi %2, %c4_i32 : i32
    %4 = tpu.iota {dimensions = array<i32: 1>} : vector<1x128xi32>
    %5 = vector.broadcast %3 : i32 to vector<1x128xi32>
    %6 = arith.addi %5, %4 : vector<1x128xi32>
    %c0_i32 = arith.constant 0 : i32
    %7 = vector.broadcast %c0_i32 : i32 to vector<1x128xi32>
    %8 = arith.cmpi ne, %6, %7 : vector<1x128xi32>
    %9 = arith.extui %8 : vector<1x128xi1> to vector<1x128xi32>
    %10 = arith.sitofp %9 : vector<1x128xi32> to vector<1x128xf32>
    %c239_i32 = arith.constant 239 : i32
    %11 = vector.broadcast %c239_i32 : i32 to vector<1x128xi32>
    %12 = arith.cmpi ne, %6, %11 : vector<1x128xi32>
    %13 = arith.extui %12 : vector<1x128xi1> to vector<1x128xi32>
    %14 = arith.sitofp %13 : vector<1x128xi32> to vector<1x128xf32>
    %c0_3 = arith.constant 0 : index
    %c0_4 = arith.constant 0 : index
    %15 = vector.load %arg4[%c0_3, %c0_4] : memref<16x3xf32, #tpu.memory_space<vmem>>, vector<16x1xf32>
    %cst = arith.constant 0.000000e+00 : f32
    %16 = vector.broadcast %cst : f32 to vector<1x1xf32>
    %17 = vector.extract_strided_slice %1 {offsets = [0, 0], sizes = [1, 127], strides = [1, 1]} : vector<1x128xf32> to vector<1x127xf32>
    %18 = tpu.concatenate %16, %17 in 1 : vector<1x1xf32>, vector<1x127xf32> -> vector<1x128xf32>
    %19 = arith.mulf %18, %10 : vector<1x128xf32>
    %20 = vector.broadcast %15 : vector<16x1xf32> to vector<16x128xf32>
    %21 = vector.broadcast %19 : vector<1x128xf32> to vector<16x128xf32>
    %22 = arith.mulf %20, %21 : vector<16x128xf32>
    %c0_5 = arith.constant 0 : index
    %c1 = arith.constant 1 : index
    %23 = vector.load %arg4[%c0_5, %c1] : memref<16x3xf32, #tpu.memory_space<vmem>>, vector<16x1xf32>
    %24 = vector.broadcast %23 : vector<16x1xf32> to vector<16x128xf32>
    %25 = vector.broadcast %1 : vector<1x128xf32> to vector<16x128xf32>
    %26 = arith.mulf %24, %25 : vector<16x128xf32>
    %27 = arith.addf %22, %26 : vector<16x128xf32>
    %c0_6 = arith.constant 0 : index
    %c2 = arith.constant 2 : index
    %28 = vector.load %arg4[%c0_6, %c2] : memref<16x3xf32, #tpu.memory_space<vmem>>, vector<16x1xf32>
    %29 = vector.extract_strided_slice %1 {offsets = [0, 1], sizes = [1, 127], strides = [1, 1]} : vector<1x128xf32> to vector<1x127xf32>
    %cst_7 = arith.constant 0.000000e+00 : f32
    %30 = vector.broadcast %cst_7 : f32 to vector<1x1xf32>
    %31 = tpu.concatenate %29, %30 in 1 : vector<1x127xf32>, vector<1x1xf32> -> vector<1x128xf32>
    %32 = arith.mulf %31, %14 : vector<1x128xf32>
    %33 = vector.broadcast %28 : vector<16x1xf32> to vector<16x128xf32>
    %34 = vector.broadcast %32 : vector<1x128xf32> to vector<16x128xf32>
    %35 = arith.mulf %33, %34 : vector<16x128xf32>
    %36 = arith.addf %27, %35 : vector<16x128xf32>
    %c0_8 = arith.constant 0 : index
    %c0_9 = arith.constant 0 : index
    %37 = vector.load %arg5[%c0_8, %c0_9] : memref<16x1xf32, #tpu.memory_space<vmem>>, vector<16x1xf32>
    %38 = vector.broadcast %37 : vector<16x1xf32> to vector<16x128xf32>
    %39 = arith.addf %36, %38 : vector<16x128xf32>
    %cst_10 = arith.constant 0.000000e+00 : f32
    %40 = vector.broadcast %cst_10 : f32 to vector<16x128xf32>
    %41 = arith.maximumf %39, %40 : vector<16x128xf32>
    %c0_11 = arith.constant 0 : index
    %c0_12 = arith.constant 0 : index
    %c0_13 = arith.constant 0 : index
    %42 = vector.load %arg6[%c0_11, %c0_12, %c0_13] : memref<3x16x16xf32, #tpu.memory_space<vmem>>, vector<1x16x16xf32>
    %43 = vector.shape_cast %42 : vector<1x16x16xf32> to vector<16x16xf32>
    %cst_14 = arith.constant 0.000000e+00 : f32
    %44 = vector.broadcast %cst_14 : f32 to vector<16x1xf32>
    %45 = vector.extract_strided_slice %41 {offsets = [0, 0], sizes = [16, 127], strides = [1, 1]} : vector<16x128xf32> to vector<16x127xf32>
    %46 = tpu.concatenate %44, %45 in 1 : vector<16x1xf32>, vector<16x127xf32> -> vector<16x128xf32>
    %47 = vector.broadcast %10 : vector<1x128xf32> to vector<16x128xf32>
    %48 = arith.mulf %46, %47 : vector<16x128xf32>
    %cst_15 = arith.constant dense<0.000000e+00> : vector<16x128xf32>
    %49 = tpu.matmul %43, %48, %cst_15 {dimension_numbers = #tpu.dot_dimension_numbers<[1], [0], [0], [1], [0, 0, 1, 1], [], []>} : vector<16x16xf32>, vector<16x128xf32>, vector<16x128xf32> -> vector<16x128xf32>
    %c1_16 = arith.constant 1 : index
    %c0_17 = arith.constant 0 : index
    %c0_18 = arith.constant 0 : index
    %50 = vector.load %arg6[%c1_16, %c0_17, %c0_18] : memref<3x16x16xf32, #tpu.memory_space<vmem>>, vector<1x16x16xf32>
    %51 = vector.shape_cast %50 : vector<1x16x16xf32> to vector<16x16xf32>
    %cst_19 = arith.constant dense<0.000000e+00> : vector<16x128xf32>
    %52 = tpu.matmul %51, %41, %cst_19 {dimension_numbers = #tpu.dot_dimension_numbers<[1], [0], [0], [1], [0, 0, 1, 1], [], []>} : vector<16x16xf32>, vector<16x128xf32>, vector<16x128xf32> -> vector<16x128xf32>
    %53 = arith.addf %49, %52 : vector<16x128xf32>
    %c2_20 = arith.constant 2 : index
    %c0_21 = arith.constant 0 : index
    %c0_22 = arith.constant 0 : index
    %54 = vector.load %arg6[%c2_20, %c0_21, %c0_22] : memref<3x16x16xf32, #tpu.memory_space<vmem>>, vector<1x16x16xf32>
    %55 = vector.shape_cast %54 : vector<1x16x16xf32> to vector<16x16xf32>
    %56 = vector.extract_strided_slice %41 {offsets = [0, 1], sizes = [16, 127], strides = [1, 1]} : vector<16x128xf32> to vector<16x127xf32>
    %cst_23 = arith.constant 0.000000e+00 : f32
    %57 = vector.broadcast %cst_23 : f32 to vector<16x1xf32>
    %58 = tpu.concatenate %56, %57 in 1 : vector<16x127xf32>, vector<16x1xf32> -> vector<16x128xf32>
    %59 = vector.broadcast %14 : vector<1x128xf32> to vector<16x128xf32>
    %60 = arith.mulf %58, %59 : vector<16x128xf32>
    %cst_24 = arith.constant dense<0.000000e+00> : vector<16x128xf32>
    %61 = tpu.matmul %55, %60, %cst_24 {dimension_numbers = #tpu.dot_dimension_numbers<[1], [0], [0], [1], [0, 0, 1, 1], [], []>} : vector<16x16xf32>, vector<16x128xf32>, vector<16x128xf32> -> vector<16x128xf32>
    %62 = arith.addf %53, %61 : vector<16x128xf32>
    %c0_25 = arith.constant 0 : index
    %c0_26 = arith.constant 0 : index
    %c0_27 = arith.constant 0 : index
    %63 = vector.load %arg3[%c0_25, %c0_26, %c0_27] : memref<1x16x1xf32, #tpu.memory_space<vmem>>, vector<1x16x1xf32>
    %64 = vector.shape_cast %63 : vector<1x16x1xf32> to vector<16x1xf32>
    %65 = vector.broadcast %64 : vector<16x1xf32> to vector<16x128xf32>
    %66 = arith.addf %62, %65 : vector<16x128xf32>
    %c0_28 = arith.constant 0 : index
    %c0_29 = arith.constant 0 : index
    %c0_30 = arith.constant 0 : index
    %67 = vector.load %arg7[%c0_28, %c0_29, %c0_30] : memref<3x16x16xf32, #tpu.memory_space<vmem>>, vector<1x16x16xf32>
    %68 = vector.shape_cast %67 : vector<1x16x16xf32> to vector<16x16xf32>
    %cst_31 = arith.constant 0.000000e+00 : f32
    %69 = vector.broadcast %cst_31 : f32 to vector<16x1xf32>
    %70 = vector.extract_strided_slice %66 {offsets = [0, 0], sizes = [16, 127], strides = [1, 1]} : vector<16x128xf32> to vector<16x127xf32>
    %71 = tpu.concatenate %69, %70 in 1 : vector<16x1xf32>, vector<16x127xf32> -> vector<16x128xf32>
    %72 = vector.broadcast %10 : vector<1x128xf32> to vector<16x128xf32>
    %73 = arith.mulf %71, %72 : vector<16x128xf32>
    %cst_32 = arith.constant dense<0.000000e+00> : vector<16x128xf32>
    %74 = tpu.matmul %68, %73, %cst_32 {dimension_numbers = #tpu.dot_dimension_numbers<[1], [0], [0], [1], [0, 0, 1, 1], [], []>} : vector<16x16xf32>, vector<16x128xf32>, vector<16x128xf32> -> vector<16x128xf32>
    %c1_33 = arith.constant 1 : index
    %c0_34 = arith.constant 0 : index
    %c0_35 = arith.constant 0 : index
    %75 = vector.load %arg7[%c1_33, %c0_34, %c0_35] : memref<3x16x16xf32, #tpu.memory_space<vmem>>, vector<1x16x16xf32>
    %76 = vector.shape_cast %75 : vector<1x16x16xf32> to vector<16x16xf32>
    %cst_36 = arith.constant dense<0.000000e+00> : vector<16x128xf32>
    %77 = tpu.matmul %76, %66, %cst_36 {dimension_numbers = #tpu.dot_dimension_numbers<[1], [0], [0], [1], [0, 0, 1, 1], [], []>} : vector<16x16xf32>, vector<16x128xf32>, vector<16x128xf32> -> vector<16x128xf32>
    %78 = arith.addf %74, %77 : vector<16x128xf32>
    %c2_37 = arith.constant 2 : index
    %c0_38 = arith.constant 0 : index
    %c0_39 = arith.constant 0 : index
    %79 = vector.load %arg7[%c2_37, %c0_38, %c0_39] : memref<3x16x16xf32, #tpu.memory_space<vmem>>, vector<1x16x16xf32>
    %80 = vector.shape_cast %79 : vector<1x16x16xf32> to vector<16x16xf32>
    %81 = vector.extract_strided_slice %66 {offsets = [0, 1], sizes = [16, 127], strides = [1, 1]} : vector<16x128xf32> to vector<16x127xf32>
    %cst_40 = arith.constant 0.000000e+00 : f32
    %82 = vector.broadcast %cst_40 : f32 to vector<16x1xf32>
    %83 = tpu.concatenate %81, %82 in 1 : vector<16x127xf32>, vector<16x1xf32> -> vector<16x128xf32>
    %84 = vector.broadcast %14 : vector<1x128xf32> to vector<16x128xf32>
    %85 = arith.mulf %83, %84 : vector<16x128xf32>
    %cst_41 = arith.constant dense<0.000000e+00> : vector<16x128xf32>
    %86 = tpu.matmul %80, %85, %cst_41 {dimension_numbers = #tpu.dot_dimension_numbers<[1], [0], [0], [1], [0, 0, 1, 1], [], []>} : vector<16x16xf32>, vector<16x128xf32>, vector<16x128xf32> -> vector<16x128xf32>
    %87 = arith.addf %78, %86 : vector<16x128xf32>
    %c0_42 = arith.constant 0 : index
    %c0_43 = arith.constant 0 : index
    %88 = vector.load %arg8[%c0_42, %c0_43] : memref<16x1xf32, #tpu.memory_space<vmem>>, vector<16x1xf32>
    %89 = vector.broadcast %88 : vector<16x1xf32> to vector<16x128xf32>
    %90 = arith.addf %87, %89 : vector<16x128xf32>
    %cst_44 = arith.constant 0.000000e+00 : f32
    %91 = vector.broadcast %cst_44 : f32 to vector<16x128xf32>
    %92 = arith.maximumf %90, %91 : vector<16x128xf32>
    %c0_45 = arith.constant 0 : index
    %c0_46 = arith.constant 0 : index
    %93 = vector.load %arg9[%c0_45, %c0_46] : memref<16x3xf32, #tpu.memory_space<vmem>>, vector<16x1xf32>
    %cst_47 = arith.constant 0.000000e+00 : f32
    %94 = vector.broadcast %cst_47 : f32 to vector<16x1xf32>
    %95 = vector.extract_strided_slice %92 {offsets = [0, 0], sizes = [16, 127], strides = [1, 1]} : vector<16x128xf32> to vector<16x127xf32>
    %96 = tpu.concatenate %94, %95 in 1 : vector<16x1xf32>, vector<16x127xf32> -> vector<16x128xf32>
    %97 = vector.broadcast %10 : vector<1x128xf32> to vector<16x128xf32>
    %98 = arith.mulf %96, %97 : vector<16x128xf32>
    %99 = vector.broadcast %93 : vector<16x1xf32> to vector<16x128xf32>
    %100 = arith.mulf %99, %98 : vector<16x128xf32>
    %c0_48 = arith.constant 0 : index
    %c1_49 = arith.constant 1 : index
    %101 = vector.load %arg9[%c0_48, %c1_49] : memref<16x3xf32, #tpu.memory_space<vmem>>, vector<16x1xf32>
    %102 = vector.broadcast %101 : vector<16x1xf32> to vector<16x128xf32>
    %103 = arith.mulf %102, %92 : vector<16x128xf32>
    %104 = arith.addf %100, %103 : vector<16x128xf32>
    %c0_50 = arith.constant 0 : index
    %c2_51 = arith.constant 2 : index
    %105 = vector.load %arg9[%c0_50, %c2_51] : memref<16x3xf32, #tpu.memory_space<vmem>>, vector<16x1xf32>
    %106 = vector.extract_strided_slice %92 {offsets = [0, 1], sizes = [16, 127], strides = [1, 1]} : vector<16x128xf32> to vector<16x127xf32>
    %cst_52 = arith.constant 0.000000e+00 : f32
    %107 = vector.broadcast %cst_52 : f32 to vector<16x1xf32>
    %108 = tpu.concatenate %106, %107 in 1 : vector<16x127xf32>, vector<16x1xf32> -> vector<16x128xf32>
    %109 = vector.broadcast %14 : vector<1x128xf32> to vector<16x128xf32>
    %110 = arith.mulf %108, %109 : vector<16x128xf32>
    %111 = vector.broadcast %105 : vector<16x1xf32> to vector<16x128xf32>
    %112 = arith.mulf %111, %110 : vector<16x128xf32>
    %113 = arith.addf %104, %112 : vector<16x128xf32>
    %cst_53 = arith.constant dense<0.000000e+00> : vector<128xf32>
    %114 = vector.multi_reduction <add>, %113, %cst_53 [0] : vector<16x128xf32> to vector<128xf32>
    %115 = vector.shape_cast %114 : vector<128xf32> to vector<1x128xf32>
    %c0_54 = arith.constant 0 : index
    %c0_55 = arith.constant 0 : index
    %116 = vector.load %arg10[%c0_54, %c0_55] : memref<1x1xf32, #tpu.memory_space<vmem>>, vector<1x1xf32>
    %117 = vector.broadcast %116 : vector<1x1xf32> to vector<1x128xf32>
    %118 = arith.addf %115, %117 : vector<1x128xf32>
    %119 = vector.extract_strided_slice %1 {offsets = [0, 4], sizes = [1, 120], strides = [1, 1]} : vector<1x128xf32> to vector<1x120xf32>
    %120 = vector.extract_strided_slice %118 {offsets = [0, 4], sizes = [1, 120], strides = [1, 1]} : vector<1x128xf32> to vector<1x120xf32>
    %121 = arith.addf %119, %120 : vector<1x120xf32>
    %c0_56 = arith.constant 0 : index
    %c0_57 = arith.constant 0 : index
    %c0_58 = arith.constant 0 : index
    %c0_59 = arith.constant 0 : index
    %122 = vector.load %arg11[%c0_56, %c0_57, %c0_58, %c0_59] : memref<1x1x1x120xf32, #tpu.memory_space<vmem>>, vector<1x1x1x120xf32>
    %123 = vector.shape_cast %122 : vector<1x1x1x120xf32> to vector<1x120xf32>
    %124 = vector.shape_cast %121 : vector<1x120xf32> to vector<1x1x1x120xf32>
    tpu.vector_store %arg11[%c0_56, %c0_57, %c0_58, %c0_59], %124 {strides = array<i32>} : memref<1x1x1x120xf32, #tpu.memory_space<vmem>>, vector<1x1x1x120xf32>,
    return
  }
  func.func @transform_0(%arg0: i32, %arg1: i32) -> (i32, i32, i32, i32) {
    %c0_i32 = arith.constant 0 : i32
    %c0_i32_0 = arith.constant 0 : i32
    %c0_i32_1 = arith.constant 0 : i32
    return %arg0, %arg1, %c0_i32, %c0_i32_0 : i32, i32, i32, i32
  }
  func.func @transform_1(%arg0: i32, %arg1: i32) -> (i32, i32, i32) {
    %c0_i32 = arith.constant 0 : i32
    %c0_i32_0 = arith.constant 0 : i32
    %c0_i32_1 = arith.constant 0 : i32
    return %arg0, %c0_i32, %c0_i32_0 : i32, i32, i32
  }
  func.func @transform_2(%arg0: i32, %arg1: i32) -> (i32, i32) {
    %c0_i32 = arith.constant 0 : i32
    %c0_i32_0 = arith.constant 0 : i32
    %c0_i32_1 = arith.constant 0 : i32
    return %c0_i32, %c0_i32_0 : i32, i32
  }
  func.func @transform_3(%arg0: i32, %arg1: i32) -> (i32, i32) {
    %c0_i32 = arith.constant 0 : i32
    %c0_i32_0 = arith.constant 0 : i32
    %c0_i32_1 = arith.constant 0 : i32
    return %c0_i32, %c0_i32_0 : i32, i32
  }
  func.func @transform_4(%arg0: i32, %arg1: i32) -> (i32, i32, i32) {
    %c0_i32 = arith.constant 0 : i32
    %c0_i32_0 = arith.constant 0 : i32
    %c0_i32_1 = arith.constant 0 : i32
    %c0_i32_2 = arith.constant 0 : i32
    return %c0_i32, %c0_i32_0, %c0_i32_1 : i32, i32, i32
  }
  func.func @transform_5(%arg0: i32, %arg1: i32) -> (i32, i32, i32) {
    %c0_i32 = arith.constant 0 : i32
    %c0_i32_0 = arith.constant 0 : i32
    %c0_i32_1 = arith.constant 0 : i32
    %c0_i32_2 = arith.constant 0 : i32
    return %c0_i32, %c0_i32_0, %c0_i32_1 : i32, i32, i32
  }
  func.func @transform_6(%arg0: i32, %arg1: i32) -> (i32, i32) {
    %c0_i32 = arith.constant 0 : i32
    %c0_i32_0 = arith.constant 0 : i32
    %c0_i32_1 = arith.constant 0 : i32
    return %c0_i32, %c0_i32_0 : i32, i32
  }
  func.func @transform_7(%arg0: i32, %arg1: i32) -> (i32, i32) {
    %c0_i32 = arith.constant 0 : i32
    %c0_i32_0 = arith.constant 0 : i32
    %c0_i32_1 = arith.constant 0 : i32
    return %c0_i32, %c0_i32_0 : i32, i32
  }
  func.func @transform_8(%arg0: i32, %arg1: i32) -> (i32, i32) {
    %c0_i32 = arith.constant 0 : i32
    %c0_i32_0 = arith.constant 0 : i32
    %c0_i32_1 = arith.constant 0 : i32
    return %c0_i32, %c0_i32_0 : i32, i32
  }
  func.func @transform_9(%arg0: i32, %arg1: i32) -> (i32, i32, i32, i32) {
    %c0_i32 = arith.constant 0 : i32
    %c0_i32_0 = arith.constant 0 : i32
    %c0_i32_1 = arith.constant 0 : i32
    return %arg0, %arg1, %c0_i32, %c0_i32_0 : i32, i32, i32, i32
  }
}

</mosaic_0001>

<llo_original>
// kernel: tpu_custom_call.1
$region0: #{tpu_custom_call.1}
  #allocation0 [shape = 'u32[]', space=smem, size = 0x4, offset = 0x4, fixed_abs, tag = 'smem constant byte address 0x4 - core index']
  #allocation1 [shape = 'u32[144,128]{1,0:T(1,128)}', space=vmem, size = 0x12000, scoped, tag = 'internal scratch']
  #allocation2 [shape = 'f32[1,1]{1,0:T(1,128)S(1)}', space=vmem, size = 0x200, scoped, tag = 'scoped memory for tpu_custom_call.1']
  %s0 = inlined_call_operand.vmem [shape: f32[2,2,1,128], index: 0, kind: input, shape index: {}]
  %s1 = inlined_call_operand.vmem [shape: f32[2,16,1], index: 1, kind: input, shape index: {}]
  %s2 = inlined_call_operand.vmem [shape: f32[16,3], index: 2, kind: input, shape index: {}]
  %s3 = inlined_call_operand.vmem [shape: f32[16,1], index: 3, kind: input, shape index: {}]
  %s4 = inlined_call_operand.vmem [shape: f32[3,16,16], index: 4, kind: input, shape index: {}]
  %s5 = inlined_call_operand.vmem [shape: f32[3,16,16], index: 5, kind: input, shape index: {}]
  %s6 = inlined_call_operand.vmem [shape: f32[16,1], index: 6, kind: input, shape index: {}]
  %s7 = inlined_call_operand.vmem [shape: f32[16,3], index: 7, kind: input, shape index: {}]
  %s8 = inlined_call_operand.<no memory space> [shape: f32[1,1], index: 8, kind: input, shape index: {}]
  %s9 = inlined_call_operand.hbm [shape: f32[2,2,1,120], index: 9, kind: output, shape index: {}]
  %s10 = sld [smem:[#allocation0]]
  $region69: #{tpu_custom_call.1} parent=0
    _
  %s12 = ssub.s32 1, %s10
  %s13 = scalar_select 0, %s12, %s10
  %v14 = vstv %s8
  %15 = vst [vmem:[#allocation2] sm:$0x1] %v14
  $region1: #{tpu_custom_call.1} parent=0
    #allocation3 [shape = 'u8[1024]{0}', space=vmem, size = 0x400, scoped, tag = 'output window, operand 0']
    #allocation4 [shape = 's32[2]{0}', space=sflag, size = 0x8, scoped, tag = 'scoped memory for tpu_custom_call.1']
    %16 = vsyncpa [#allocation4], 0
    %s17 = scalar_lea.sflag [#allocation4], 1
    %18 = vsyncpa %s17, 0
    loop: start=0, step=1, limit=6
    $region2: #{tpu_custom_call.1} parent=1 // loop_pre_header
      _
    $region3: #{tpu_custom_call.1} parent=1 // loop_header
      %s20 = sphi 0, %s24
      %p21 = scmp.ge.s32.totalorder %s20, 6
      %s27 = sphi 0, %s39
      %s28 = sphi 0, %s35
      %s29 = sphi 0, %s27
      %s30 = sphi 0, %s28
      %s31 = sphi 0, %s29
      %s32 = sphi 0, %s30
      %s44 = sphi 0, %s46
      %s47 = sphi 0, %s44
      %s48 = sphi 0, %s47
      %s64 = sphi 0, %s48
      %s70 = sphi 0, %s72
      %s73 = sphi 0, %s70
      %s74 = sphi 0, %s73
      %s90 = sphi 0, %s74
      %s94 = sphi 0, %s94
      %s96 = sphi 0, %s94
      %s97 = sphi 0, %s96
      %s111 = sphi 0, %s97
      %s115 = sphi 0, %s115
      %s117 = sphi 0, %s115
      %s118 = sphi 0, %s117
      %s132 = sphi 0, %s118
      %s136 = sphi 0, %s136
      %s138 = sphi 0, %s136
      %s139 = sphi 0, %s138
      %s153 = sphi 0, %s139
      %s157 = sphi 0, %s157
      %s159 = sphi 0, %s157
      %s160 = sphi 0, %s159
      %s174 = sphi 0, %s160
      %s178 = sphi 0, %s178
      %s180 = sphi 0, %s178
      %s181 = sphi 0, %s180
      %s195 = sphi 0, %s181
      %s199 = sphi 0, %s199
      %s201 = sphi 0, %s199
      %s202 = sphi 0, %s201
      %s216 = sphi 0, %s202
      %s220 = sphi 0, %s220
      %s222 = sphi 0, %s220
      %s223 = sphi 0, %s222
      %s237 = sphi 0, %s223
      %s245 = sphi 0, %s247
      %s248 = sphi 0, %s245
      %s249 = sphi 0, %s248
      %s265 = sphi 0, %s249
    $region4: #{tpu_custom_call.1} parent=1 // loop_header_branch
      %23 = sbr.rel (%p21) target = $region8
    $region5: #{tpu_custom_call.1} parent=1 // loop_body
      %s25 = ssub.s32 %s20, 1
      %s26 = ssub.s32 %s20, 2
      %s33 = sadd.s32 1, %s28
      %p34 = scmp.ge.s32.totalorder %s33, 2
      %s35 = scalar_select %p34, 0, %s33
      %s36 = sadd.s32 1, %s27
      %s37 = scalar_select %p34, %s36, %s27
      %p38 = scmp.ge.s32.totalorder %s37, 2
      %s39 = scalar_select %p38, 0, %s37
      %s40 = ssub.s32 %s27, %s39
      %s41 = ssub.s32 %s28, %s35
      %s42 = sor.u32 %s40, %s41
      %p43 = scmp.eq.s32.totalorder %s42, 0
      %s45 = sadd.s32 %s44, 1
      %s46 = scalar_select %p43, %s44, %s45
      %p49 = pneg %p43
      %p50 = scmp.eq.s32.totalorder %s20, 3
      %p51 = por %p49, %p50
      %p52 = scmp.ne.s32.totalorder %s44, %s47
      %p53 = scmp.eq.s32.totalorder %s20, 0
      %p54 = por %p52, %p53
      %p55 = scmp.ne.s32.totalorder %s44, %s47
      %p56 = scmp.eq.s32.totalorder %s25, 3
      %p57 = por %p55, %p56
      %p58 = scmp.ne.s32.totalorder %s47, %s48
      %p59 = scmp.eq.s32.totalorder %s25, 0
      %p60 = por %p58, %p59
      %p61 = scmp.ne.s32.totalorder %s47, %s48
      %p62 = scmp.eq.s32.totalorder %s26, 3
      %p63 = por %p61, %p62
      %p65 = scmp.ne.s32.totalorder %s48, %s64
      %p66 = scmp.eq.s32.totalorder %s26, 0
      %p67 = por %p65, %p66
      %s68 = ssub.s32 %s27, %s39
      %p69 = scmp.eq.s32.totalorder %s68, 0
      %s71 = sadd.s32 %s70, 1
      %s72 = scalar_select %p69, %s70, %s71
      %p75 = pneg %p69
      %p76 = scmp.eq.s32.totalorder %s20, 3
      %p77 = por %p75, %p76
      %p78 = scmp.ne.s32.totalorder %s70, %s73
      %p79 = scmp.eq.s32.totalorder %s20, 0
      %p80 = por %p78, %p79
      %p81 = scmp.ne.s32.totalorder %s70, %s73
      %p82 = scmp.eq.s32.totalorder %s25, 3
      %p83 = por %p81, %p82
      %p84 = scmp.ne.s32.totalorder %s73, %s74
      %p85 = scmp.eq.s32.totalorder %s25, 0
      %p86 = por %p84, %p85
      %p87 = scmp.ne.s32.totalorder %s73, %s74
      %p88 = scmp.eq.s32.totalorder %s26, 3
      %p89 = por %p87, %p88
      %p91 = scmp.ne.s32.totalorder %s74, %s90
      %p92 = scmp.eq.s32.totalorder %s26, 0
      %p93 = por %p91, %p92
      %s95 = sadd.s32 %s94, 1
      %p98 = scmp.eq.s32.totalorder %s20, 3
      %p99 = scmp.ne.s32.totalorder %s94, %s96
      %p100 = scmp.eq.s32.totalorder %s20, 0
      %p101 = por %p99, %p100
      %p102 = scmp.ne.s32.totalorder %s94, %s96
      %p103 = scmp.eq.s32.totalorder %s25, 3
      %p104 = por %p102, %p103
      %p105 = scmp.ne.s32.totalorder %s96, %s97
      %p106 = scmp.eq.s32.totalorder %s25, 0
      %p107 = por %p105, %p106
      %p108 = scmp.ne.s32.totalorder %s96, %s97
      %p109 = scmp.eq.s32.totalorder %s26, 3
      %p110 = por %p108, %p109
      %p112 = scmp.ne.s32.totalorder %s97, %s111
      %p113 = scmp.eq.s32.totalorder %s26, 0
      %p114 = por %p112, %p113
      %s116 = sadd.s32 %s115, 1
      %p119 = scmp.eq.s32.totalorder %s20, 3
      %p120 = scmp.ne.s32.totalorder %s115, %s117
      %p121 = scmp.eq.s32.totalorder %s20, 0
      %p122 = por %p120, %p121
      %p123 = scmp.ne.s32.totalorder %s115, %s117
      %p124 = scmp.eq.s32.totalorder %s25, 3
      %p125 = por %p123, %p124
      %p126 = scmp.ne.s32.totalorder %s117, %s118
      %p127 = scmp.eq.s32.totalorder %s25, 0
      %p128 = por %p126, %p127
      %p129 = scmp.ne.s32.totalorder %s117, %s118
      %p130 = scmp.eq.s32.totalorder %s26, 3
      %p131 = por %p129, %p130
      %p133 = scmp.ne.s32.totalorder %s118, %s132
      %p134 = scmp.eq.s32.totalorder %s26, 0
      %p135 = por %p133, %p134
      %s137 = sadd.s32 %s136, 1
      %p140 = scmp.eq.s32.totalorder %s20, 3
      %p141 = scmp.ne.s32.totalorder %s136, %s138
      %p142 = scmp.eq.s32.totalorder %s20, 0
      %p143 = por %p141, %p142
      %p144 = scmp.ne.s32.totalorder %s136, %s138
      %p145 = scmp.eq.s32.totalorder %s25, 3
      %p146 = por %p144, %p145
      %p147 = scmp.ne.s32.totalorder %s138, %s139
      %p148 = scmp.eq.s32.totalorder %s25, 0
      %p149 = por %p147, %p148
      %p150 = scmp.ne.s32.totalorder %s138, %s139
      %p151 = scmp.eq.s32.totalorder %s26, 3
      %p152 = por %p150, %p151
      %p154 = scmp.ne.s32.totalorder %s139, %s153
      %p155 = scmp.eq.s32.totalorder %s26, 0
      %p156 = por %p154, %p155
      %s158 = sadd.s32 %s157, 1
      %p161 = scmp.eq.s32.totalorder %s20, 3
      %p162 = scmp.ne.s32.totalorder %s157, %s159
      %p163 = scmp.eq.s32.totalorder %s20, 0
      %p164 = por %p162, %p163
      %p165 = scmp.ne.s32.totalorder %s157, %s159
      %p166 = scmp.eq.s32.totalorder %s25, 3
      %p167 = por %p165, %p166
      %p168 = scmp.ne.s32.totalorder %s159, %s160
      %p169 = scmp.eq.s32.totalorder %s25, 0
      %p170 = por %p168, %p169
      %p171 = scmp.ne.s32.totalorder %s159, %s160
      %p172 = scmp.eq.s32.totalorder %s26, 3
      %p173 = por %p171, %p172
      %p175 = scmp.ne.s32.totalorder %s160, %s174
      %p176 = scmp.eq.s32.totalorder %s26, 0
      %p177 = por %p175, %p176
      %s179 = sadd.s32 %s178, 1
      %p182 = scmp.eq.s32.totalorder %s20, 3
      %p183 = scmp.ne.s32.totalorder %s178, %s180
      %p184 = scmp.eq.s32.totalorder %s20, 0
      %p185 = por %p183, %p184
      %p186 = scmp.ne.s32.totalorder %s178, %s180
      %p187 = scmp.eq.s32.totalorder %s25, 3
      %p188 = por %p186, %p187
      %p189 = scmp.ne.s32.totalorder %s180, %s181
      %p190 = scmp.eq.s32.totalorder %s25, 0
      %p191 = por %p189, %p190
      %p192 = scmp.ne.s32.totalorder %s180, %s181
      %p193 = scmp.eq.s32.totalorder %s26, 3
      %p194 = por %p192, %p193
      %p196 = scmp.ne.s32.totalorder %s181, %s195
      %p197 = scmp.eq.s32.totalorder %s26, 0
      %p198 = por %p196, %p197
      %s200 = sadd.s32 %s199, 1
      %p203 = scmp.eq.s32.totalorder %s20, 3
      %p204 = scmp.ne.s32.totalorder %s199, %s201
      %p205 = scmp.eq.s32.totalorder %s20, 0
      %p206 = por %p204, %p205
      %p207 = scmp.ne.s32.totalorder %s199, %s201
      %p208 = scmp.eq.s32.totalorder %s25, 3
      %p209 = por %p207, %p208
      %p210 = scmp.ne.s32.totalorder %s201, %s202
      %p211 = scmp.eq.s32.totalorder %s25, 0
      %p212 = por %p210, %p211
      %p213 = scmp.ne.s32.totalorder %s201, %s202
      %p214 = scmp.eq.s32.totalorder %s26, 3
      %p215 = por %p213, %p214
      %p217 = scmp.ne.s32.totalorder %s202, %s216
      %p218 = scmp.eq.s32.totalorder %s26, 0
      %p219 = por %p217, %p218
      %s221 = sadd.s32 %s220, 1
      %p224 = scmp.eq.s32.totalorder %s20, 3
      %p225 = scmp.ne.s32.totalorder %s220, %s222
      %p226 = scmp.eq.s32.totalorder %s20, 0
      %p227 = por %p225, %p226
      %p228 = scmp.ne.s32.totalorder %s220, %s222
      %p229 = scmp.eq.s32.totalorder %s25, 3
      %p230 = por %p228, %p229
      %p231 = scmp.ne.s32.totalorder %s222, %s223
      %p232 = scmp.eq.s32.totalorder %s25, 0
      %p233 = por %p231, %p232
      %p234 = scmp.ne.s32.totalorder %s222, %s223
      %p235 = scmp.eq.s32.totalorder %s26, 3
      %p236 = por %p234, %p235
      %p238 = scmp.ne.s32.totalorder %s223, %s237
      %p239 = scmp.eq.s32.totalorder %s26, 0
      %p240 = por %p238, %p239
      %s241 = ssub.s32 %s27, %s39
      %s242 = ssub.s32 %s28, %s35
      %s243 = sor.u32 %s241, %s242
      %p244 = scmp.eq.s32.totalorder %s243, 0
      %s246 = sadd.s32 %s245, 1
      %s247 = scalar_select %p244, %s245, %s246
      %p250 = pneg %p244
      %p251 = scmp.eq.s32.totalorder %s20, 3
      %p252 = por %p250, %p251
      %p253 = scmp.ne.s32.totalorder %s245, %s248
      %p254 = scmp.eq.s32.totalorder %s20, 0
      %p255 = por %p253, %p254
      %p256 = scmp.ne.s32.totalorder %s245, %s248
      %p257 = scmp.eq.s32.totalorder %s25, 3
      %p258 = por %p256, %p257
      %p259 = scmp.ne.s32.totalorder %s248, %s249
      %p260 = scmp.eq.s32.totalorder %s25, 0
      %p261 = por %p259, %p260
      %p262 = scmp.ne.s32.totalorder %s248, %s249
      %p263 = scmp.eq.s32.totalorder %s26, 3
      %p264 = por %p262, %p263
      %p266 = scmp.ne.s32.totalorder %s249, %s265
      %p267 = scmp.eq.s32.totalorder %s26, 0
      %p268 = por %p266, %p267
      %p269 = scmp.le.s32.totalorder 1, %s20
      %p270 = scmp.lt.s32.totalorder %s20, 5
      %p271 = pnand %p269, %p270
      %p272 = pneg %p271
      // Predicated region
      $region9: #{tpu_custom_call.1} parent=5 // pred_check
        _
      $region10: #{tpu_custom_call.1} parent=5 // pred_check_branch
        %274 = sbr.rel (%p271) target = $region12
      $region11: #{tpu_custom_call.1} parent=5 // pred_region
        %s275 = ssub.s32 %s20, 1
        // Predicated region
        $region13: #{tpu_custom_call.1} parent=11 // pred_check
          %p276 = pneg %p107
        $region14: #{tpu_custom_call.1} parent=11 // pred_check_branch
          %278 = sbr.rel (%p276) target = $region16
        $region15: #{tpu_custom_call.1} parent=11 // pred_region
          _
        $region16: #{tpu_custom_call.1} parent=11 // pred_fallthru
          _
        // Predicated region
        $region17: #{tpu_custom_call.1} parent=11 // pred_check
          %p279 = pneg %p128
        $region18: #{tpu_custom_call.1} parent=11 // pred_check_branch
          %281 = sbr.rel (%p279) target = $region20
        $region19: #{tpu_custom_call.1} parent=11 // pred_region
          _
        $region20: #{tpu_custom_call.1} parent=11 // pred_fallthru
          _
        // Predicated region
        $region21: #{tpu_custom_call.1} parent=11 // pred_check
          %p282 = pneg %p149
        $region22: #{tpu_custom_call.1} parent=11 // pred_check_branch
          %284 = sbr.rel (%p282) target = $region24
        $region23: #{tpu_custom_call.1} parent=11 // pred_region
          _
        $region24: #{tpu_custom_call.1} parent=11 // pred_fallthru
          _
        // Predicated region
        $region25: #{tpu_custom_call.1} parent=11 // pred_check
          %p285 = pneg %p170
        $region26: #{tpu_custom_call.1} parent=11 // pred_check_branch
          %287 = sbr.rel (%p285) target = $region28
        $region27: #{tpu_custom_call.1} parent=11 // pred_region
          _
        $region28: #{tpu_custom_call.1} parent=11 // pred_fallthru
          _
        // Predicated region
        $region29: #{tpu_custom_call.1} parent=11 // pred_check
          %p288 = pneg %p191
        $region30: #{tpu_custom_call.1} parent=11 // pred_check_branch
          %290 = sbr.rel (%p288) target = $region32
        $region31: #{tpu_custom_call.1} parent=11 // pred_region
          _
        $region32: #{tpu_custom_call.1} parent=11 // pred_fallthru
          _
        // Predicated region
        $region33: #{tpu_custom_call.1} parent=11 // pred_check
          %p291 = pneg %p212
        $region34: #{tpu_custom_call.1} parent=11 // pred_check_branch
          %293 = sbr.rel (%p291) target = $region36
        $region35: #{tpu_custom_call.1} parent=11 // pred_region
          _
        $region36: #{tpu_custom_call.1} parent=11 // pred_fallthru
          _
        // Predicated region
        $region37: #{tpu_custom_call.1} parent=11 // pred_check
          %p294 = pneg %p233
        $region38: #{tpu_custom_call.1} parent=11 // pred_check_branch
          %296 = sbr.rel (%p294) target = $region40
        $region39: #{tpu_custom_call.1} parent=11 // pred_region
          _
        $region40: #{tpu_custom_call.1} parent=11 // pred_fallthru
          _
      $region12: #{tpu_custom_call.1} parent=5 // pred_fallthru
        _
      %p297 = scmp.lt.s32.totalorder %s20, 4
      // Predicated region
      $region41: #{tpu_custom_call.1} parent=5 // pred_check
        %p298 = pneg %p297
      $region42: #{tpu_custom_call.1} parent=5 // pred_check_branch
        %300 = sbr.rel (%p298) target = $region44
      $region43: #{tpu_custom_call.1} parent=5 // pred_region
        // Predicated region
        $region45: #{tpu_custom_call.1} parent=43 // pred_check
          %p301 = pneg %p54
        $region46: #{tpu_custom_call.1} parent=43 // pred_check_branch
          %303 = sbr.rel (%p301) target = $region48
        $region47: #{tpu_custom_call.1} parent=43 // pred_region
          %p304 = scmp.lt.s32.totalorder %s27, 1
          %s305 = scalar_select %p304, %s27, 1
          %p306 = scmp.lt.s32.totalorder %s28, 1
          %s307 = scalar_select %p306, %s28, 1
          %s308 = smul.addr %s305, 2
          %s309 = sadd.s32 %s307, %s308
          %s310 = scalar_lea.vmem %s0, %s309
        $region48: #{tpu_custom_call.1} parent=43 // pred_fallthru
          _
        // Predicated region
        $region49: #{tpu_custom_call.1} parent=43 // pred_check
          %p311 = pneg %p80
        $region50: #{tpu_custom_call.1} parent=43 // pred_check_branch
          %313 = sbr.rel (%p311) target = $region52
        $region51: #{tpu_custom_call.1} parent=43 // pred_region
          %p314 = scmp.lt.s32.totalorder %s27, 1
          %s315 = scalar_select %p314, %s27, 1
          %s316 = smul.addr %s315, 2
          %s317 = smul.addr %s316, 8
          %s318 = scalar_lea.vmem %s1, %s317
        $region52: #{tpu_custom_call.1} parent=43 // pred_fallthru
          _
      $region44: #{tpu_custom_call.1} parent=5 // pred_fallthru
        _
      %p319 = scmp.le.s32.totalorder 1, %s20
      %p320 = scmp.lt.s32.totalorder %s20, 5
      %p321 = pnand %p319, %p320
      %p322 = pneg %p321
      // Predicated region
      $region53: #{tpu_custom_call.1} parent=5 // pred_check
        _
      $region54: #{tpu_custom_call.1} parent=5 // pred_check_branch
        %324 = sbr.rel (%p321) target = $region56
      $region55: #{tpu_custom_call.1} parent=5 // pred_region
        %s325 = ssub.s32 %s20, 1
        %p326 = scmp.lt.s32.totalorder %s29, 1
        %s327 = scalar_select %p326, %s29, 1
        %p328 = scmp.lt.s32.totalorder %s30, 1
        %s329 = scalar_select %p328, %s30, 1
        %s330 = smul.addr %s327, 2
        %s331 = sadd.s32 %s329, %s330
        %s332 = scalar_lea.vmem %s0, %s331
        %p333 = pneg %p60
        %p334 = pneg %p57
        %p335 = scmp.lt.s32.totalorder %s29, 1
        %s336 = scalar_select %p335, %s29, 1
        %s337 = smul.addr %s336, 2
        %s338 = smul.addr %s337, 8
        %s339 = scalar_lea.vmem %s1, %s338
        %p340 = pneg %p86
        %p341 = pneg %p83
        %p342 = pneg %p107
        %p343 = pneg %p104
        %p344 = pneg %p128
        %p345 = pneg %p125
        %p346 = pneg %p149
        %p347 = pneg %p146
        %p348 = pneg %p170
        %p349 = pneg %p167
        %p350 = pneg %p191
        %p351 = pneg %p188
        %p352 = pneg %p212
        %p353 = pneg %p209
        %p354 = pneg %p233
        %p355 = pneg %p230
        %p356 = pneg %p261
        %p357 = pneg %p258
        %s358 = sand.u32 %s248, 1
        %s359 = scalar_lea.sflag [#allocation4], %s358
        %s360 = sand.u32 %s248, 1
        %s361 = scalar_lea.vmem [#allocation3], %s360
        %p362 = scmp.lt.s32.totalorder %s29, 1
        %s363 = scalar_select %p362, %s29, 1
        %p364 = scmp.lt.s32.totalorder %s30, 1
        %s365 = scalar_select %p364, %s30, 1
        %s366 = smul.addr %s363, 2
        %s367 = sadd.s32 %s365, %s366
        %s368 = scalar_lea.vmem %s0, %s367
        %p369 = scmp.lt.s32.totalorder %s29, 1
        %s370 = scalar_select %p369, %s29, 1
        %s371 = smul.addr %s370, 2
        %s372 = smul.addr %s371, 8
        %s373 = scalar_lea.vmem %s1, %s372
        %v374 = vld [vmem:[%s368] sm:$0x1]
        %s375 = smul.u32 %s30, 120
        %s376 = ssub.s32 %s375, 4
        %v377 = vlaneseq
        %v378 = vand.u32 %v377, 127
        %v379 = vstv %s376
        %v380 = vadd.s32 %v379, %v378
        %vm381 = vcmp.ne.s32.totalorder %v380, 0
        %v382 = vsel %vm381, 1, 0
        %v383 = vcvt.s32.f32 %v382
        %vm384 = vcmp.ne.s32.totalorder %v380, 239
        %v385 = vsel %vm384, 1, 0
        %v386 = vcvt.s32.f32 %v385
        %v387 = vld [vmem:[%s2] sm:$0xff]
        %v388 = vld [vmem:[%s2 + $0x8] sm:$0xff]
        %v390 = vlaneseq
        %v391 = vshrl.u32 %v390, 7
        %v392 = vsub.s32 0, %v391
        %v393 = vrot.slane %v374, %v392
        %394 = vrot.lane.b32.xlu0 %v393, 1
        %v395 = vpop.permute.xlu0 %394
        %vm397 = vcmask 7168
        %v398 = vsel %vm397, 0.0, %v395
        %v399 = vmul.f32 %v398, %v383
        %401 = vset.pattern.permute.xlu0 0
        %402 = vperm.xlu0 %401, %v387
        %v403 = vpop.permute.xlu0 %402
        %406 = vset.pattern.permute.xlu0 0
        %407 = vperm.xlu0 %406, %v388
        %v408 = vpop.permute.xlu0 %407
        %v410 = vlaneseq
        %v411 = vshrl.u32 %v410, 7
        %v412 = vsub.s32 0, %v411
        %v413 = vrot.slane %v399, %v412
        %v414 = vmul.f32 %v403, %v413
        %v415 = vmul.f32 %v408, %v413
        %416 = vset.pattern.permute.xlu0 1
        %417 = vperm.xlu0 %416, %v387
        %v418 = vpop.permute.xlu0 %417
        %420 = vset.pattern.permute.xlu0 1
        %421 = vperm.xlu0 %420, %v388
        %v422 = vpop.permute.xlu0 %421
        %v425 = vmul.f32 %v418, %v393
        %v426 = vmul.f32 %v422, %v393
        %v427 = vadd.f32 %v414, %v425
        %v428 = vadd.f32 %v415, %v426
        %429 = vrot.lane.b32.xlu0 %v393, 127
        %v430 = vpop.permute.xlu0 %429
        %vm432 = vcmask 1039360
        %v433 = vsel %vm432, %v430, 0.0
        %v434 = vmul.f32 %v433, %v386
        %435 = vset.pattern.permute.xlu0 2
        %436 = vperm.xlu0 %435, %v387
        %v437 = vpop.permute.xlu0 %436
        %439 = vset.pattern.permute.xlu0 2
        %440 = vperm.xlu0 %439, %v388
        %v441 = vpop.permute.xlu0 %440
        %v443 = vlaneseq
        %v444 = vshrl.u32 %v443, 7
        %v445 = vsub.s32 0, %v444
        %v446 = vrot.slane %v434, %v445
        %v447 = vmul.f32 %v437, %v446
        %v448 = vmul.f32 %v441, %v446
        %v449 = vadd.f32 %v427, %v447
        %v450 = vadd.f32 %v428, %v448
        %v451 = vld [vmem:[%s3] sm:$0xff]
        %v452 = vld [vmem:[%s3 + $0x8] sm:$0xff]
        %454 = vset.pattern.permute.xlu0 0
        %455 = vperm.xlu0 %454, %v451
        %v456 = vpop.permute.xlu0 %455
        %459 = vset.pattern.permute.xlu0 0
        %460 = vperm.xlu0 %459, %v452
        %v461 = vpop.permute.xlu0 %460
        %v463 = vadd.f32 %v449, %v456
        %v464 = vadd.f32 %v450, %v461
        %v465 = vmax.f32 %v463, 0.0
        %v466 = vmax.f32 %v464, 0.0
        %v467 = vld [vmem:[%s4] sm:$0xff]
        %v468 = vld [vmem:[%s4 + $0x8] sm:$0xff]
        %471 = vrot.lane.b32.xlu0 %v465, 1
        %v472 = vpop.permute.xlu0 %471
        %473 = vrot.lane.b32.xlu0 %v466, 1
        %v474 = vpop.permute.xlu0 %473
        %v477 = vsel %vm397, 0.0, %v472
        %v478 = vsel %vm397, 0.0, %v474
        %v479 = vmul.f32 %v477, %v383
        %v480 = vmul.f32 %v478, %v383
        %s481 = scalar_lea.vmem %s4, 16
        %v482 = vld [vmem:[%s481] sm:$0xff]
        %v483 = vld [vmem:[%s481 + $0x8] sm:$0xff]
        %vm484 = vcmask 130048
        %v486 = vsel %vm484, %v482, 0
        %v489 = vsel %vm484, %v483, 0
        %491 = vmatprep.subr.mxu0 0.0
        %492 = vmatpush1.msra.mxu0 %v465
        %493 = vmatprep.subr.mxu0 0.0
        %494 = vmatpush1.msra.mxu0 %v466
        %495 = vmatprep.subr.mxu0 0.0
        %496 = vmatpush1.msra.mxu0 0.0
        %497 = vmatprep.subr.mxu0 0.0
        %498 = vmatpush1.msra.mxu0 0.0
        %499 = vmatprep.subr.mxu0 0.0
        %500 = vmatpush1.msra.mxu0 0.0
        %501 = vmatprep.subr.mxu0 0.0
        %502 = vmatpush1.msra.mxu0 0.0
        %503 = vmatprep.subr.mxu0 0.0
        %504 = vmatpush1.msra.mxu0 0.0
        %505 = vmatprep.subr.mxu0 0.0
        %506 = vmatpush1.msra.mxu0 0.0
        %507 = vmatprep.subr.mxu0 0.0
        %508 = vmatpush1.msra.mxu0 0.0
        %509 = vmatprep.subr.mxu0 0.0
        %510 = vmatpush1.msra.mxu0 0.0
        %511 = vmatprep.subr.mxu0 0.0
        %512 = vmatpush1.msra.mxu0 0.0
        %513 = vmatprep.subr.mxu0 0.0
        %514 = vmatpush1.msra.mxu0 0.0
        %515 = vmatprep.subr.mxu0 0.0
        %516 = vmatpush1.msra.mxu0 0.0
        %517 = vmatprep.subr.mxu0 0.0
        %518 = vmatpush1.msra.mxu0 0.0
        %519 = vmatprep.subr.mxu0 0.0
        %520 = vmatpush1.msra.mxu0 0.0
        %521 = vmatprep.subr.mxu0 0.0
        %522 = vmatpush1.msra.mxu0 0.0
        %523 = vmatprep.subr.mxu0 0.0
        %524 = vmatpush1.msra.mxu0 0.0
        %525 = vmatprep.subr.mxu0 0.0
        %526 = vmatpush1.msra.mxu0 0.0
        %527 = vmatprep.subr.mxu0 0.0
        %528 = vmatpush1.msra.mxu0 0.0
        %529 = vmatprep.subr.mxu0 0.0
        %530 = vmatpush1.msra.mxu0 0.0
        %531 = vmatprep.subr.mxu0 0.0
        %532 = vmatpush1.msra.mxu0 0.0
        %533 = vmatprep.subr.mxu0 0.0
        %534 = vmatpush1.msra.mxu0 0.0
        %535 = vmatprep.subr.mxu0 0.0
        %536 = vmatpush1.msra.mxu0 0.0
        %537 = vmatprep.subr.mxu0 0.0
        %538 = vmatpush1.msra.mxu0 0.0
        %539 = vmatprep.subr.mxu0 0.0
        %540 = vmatpush1.msra.mxu0 0.0
        %541 = vmatprep.subr.mxu0 0.0
        %542 = vmatpush1.msra.mxu0 0.0
        %543 = vmatprep.subr.mxu0 0.0
        %544 = vmatpush1.msra.mxu0 0.0
        %545 = vmatprep.subr.mxu0 0.0
        %546 = vmatpush1.msra.mxu0 0.0
        %547 = vmatprep.subr.mxu0 0.0
        %548 = vmatpush1.msra.mxu0 0.0
        %549 = vmatprep.subr.mxu0 0.0
        %550 = vmatpush1.msra.mxu0 0.0
        %551 = vmatprep.subr.mxu0 0.0
        %552 = vmatpush1.msra.mxu0 0.0
        %553 = vmatprep.subr.mxu0 0.0
        %554 = vmatpush1.msra.mxu0 0.0
        %555 = vmatprep.mubr.f32.mxu0 0.0
        %556 = vmatmul.mubr.f32.gmra.mrb[0].mxu0 %v486
        %v557 = vpop.f32.mrb[0].mxu0
        %v558 = vadd.f32 0.0, %v557
        %v559 = vpop.f32.mrb[0].mxu0
        %560 = vmatprep.mubr.f32.mxu0 0.0
        %561 = vmatmul.mubr.f32.gmra.mrb[0].mxu0 %v489
        %v562 = vpop.f32.mrb[0].mxu0
        %v563 = vadd.f32 0.0, %v562
        %v564 = vpop.f32.mrb[0].mxu0
        %565 = vdwg.mxu0
        %v567 = vsel %vm484, %v467, 0
        %v570 = vsel %vm484, %v468, 0
        %572 = vmatprep.subr.mxu0 0.0
        %573 = vmatpush1.msra.mxu0 %v479
        %574 = vmatprep.subr.mxu0 0.0
        %575 = vmatpush1.msra.mxu0 %v480
        %576 = vmatprep.subr.mxu0 0.0
        %577 = vmatpush1.msra.mxu0 0.0
        %578 = vmatprep.subr.mxu0 0.0
        %579 = vmatpush1.msra.mxu0 0.0
        %580 = vmatprep.subr.mxu0 0.0
        %581 = vmatpush1.msra.mxu0 0.0
        %582 = vmatprep.subr.mxu0 0.0
        %583 = vmatpush1.msra.mxu0 0.0
        %584 = vmatprep.subr.mxu0 0.0
        %585 = vmatpush1.msra.mxu0 0.0
        %586 = vmatprep.subr.mxu0 0.0
        %587 = vmatpush1.msra.mxu0 0.0
        %588 = vmatprep.subr.mxu0 0.0
        %589 = vmatpush1.msra.mxu0 0.0
        %590 = vmatprep.subr.mxu0 0.0
        %591 = vmatpush1.msra.mxu0 0.0
        %592 = vmatprep.subr.mxu0 0.0
        %593 = vmatpush1.msra.mxu0 0.0
        %594 = vmatprep.subr.mxu0 0.0
        %595 = vmatpush1.msra.mxu0 0.0
        %596 = vmatprep.subr.mxu0 0.0
        %597 = vmatpush1.msra.mxu0 0.0
        %598 = vmatprep.subr.mxu0 0.0
        %599 = vmatpush1.msra.mxu0 0.0
        %600 = vmatprep.subr.mxu0 0.0
        %601 = vmatpush1.msra.mxu0 0.0
        %602 = vmatprep.subr.mxu0 0.0
        %603 = vmatpush1.msra.mxu0 0.0
        %604 = vmatprep.subr.mxu0 0.0
        %605 = vmatpush1.msra.mxu0 0.0
        %606 = vmatprep.subr.mxu0 0.0
        %607 = vmatpush1.msra.mxu0 0.0
        %608 = vmatprep.subr.mxu0 0.0
        %609 = vmatpush1.msra.mxu0 0.0
        %610 = vmatprep.subr.mxu0 0.0
        %611 = vmatpush1.msra.mxu0 0.0
        %612 = vmatprep.subr.mxu0 0.0
        %613 = vmatpush1.msra.mxu0 0.0
        %614 = vmatprep.subr.mxu0 0.0
        %615 = vmatpush1.msra.mxu0 0.0
        %616 = vmatprep.subr.mxu0 0.0
        %617 = vmatpush1.msra.mxu0 0.0
        %618 = vmatprep.subr.mxu0 0.0
        %619 = vmatpush1.msra.mxu0 0.0
        %620 = vmatprep.subr.mxu0 0.0
        %621 = vmatpush1.msra.mxu0 0.0
        %622 = vmatprep.subr.mxu0 0.0
        %623 = vmatpush1.msra.mxu0 0.0
        %624 = vmatprep.subr.mxu0 0.0
        %625 = vmatpush1.msra.mxu0 0.0
        %626 = vmatprep.subr.mxu0 0.0
        %627 = vmatpush1.msra.mxu0 0.0
        %628 = vmatprep.subr.mxu0 0.0
        %629 = vmatpush1.msra.mxu0 0.0
        %630 = vmatprep.subr.mxu0 0.0
        %631 = vmatpush1.msra.mxu0 0.0
        %632 = vmatprep.subr.mxu0 0.0
        %633 = vmatpush1.msra.mxu0 0.0
        %634 = vmatprep.subr.mxu0 0.0
        %635 = vmatpush1.msra.mxu0 0.0
        %636 = vmatprep.mubr.f32.mxu0 0.0
        %637 = vmatmul.mubr.f32.gmra.mrb[0].mxu0 %v567
        %v638 = vpop.f32.mrb[0].mxu0
        %v639 = vadd.f32 %v558, %v638
        %v640 = vpop.f32.mrb[0].mxu0
        %641 = vmatprep.mubr.f32.mxu0 0.0
        %642 = vmatmul.mubr.f32.gmra.mrb[0].mxu0 %v570
        %v643 = vpop.f32.mrb[0].mxu0
        %v644 = vadd.f32 %v563, %v643
        %v645 = vpop.f32.mrb[0].mxu0
        %646 = vdwg.mxu0
        %s647 = scalar_lea.vmem %s4, 32
        %v648 = vld [vmem:[%s647] sm:$0xff]
        %v649 = vld [vmem:[%s647 + $0x8] sm:$0xff]
        %650 = vrot.lane.b32.xlu0 %v465, 127
        %v651 = vpop.permute.xlu0 %650
        %652 = vrot.lane.b32.xlu0 %v466, 127
        %v653 = vpop.permute.xlu0 %652
        %v656 = vsel %vm432, %v651, 0.0
        %v657 = vsel %vm432, %v653, 0.0
        %v658 = vmul.f32 %v656, %v386
        %v659 = vmul.f32 %v657, %v386
        %v661 = vsel %vm484, %v648, 0
        %v664 = vsel %vm484, %v649, 0
        %666 = vmatprep.subr.mxu0 0.0
        %667 = vmatpush1.msra.mxu0 %v658
        %668 = vmatprep.subr.mxu0 0.0
        %669 = vmatpush1.msra.mxu0 %v659
        %670 = vmatprep.subr.mxu0 0.0
        %671 = vmatpush1.msra.mxu0 0.0
        %672 = vmatprep.subr.mxu0 0.0
        %673 = vmatpush1.msra.mxu0 0.0
        %674 = vmatprep.subr.mxu0 0.0
        %675 = vmatpush1.msra.mxu0 0.0
        %676 = vmatprep.subr.mxu0 0.0
        %677 = vmatpush1.msra.mxu0 0.0
        %678 = vmatprep.subr.mxu0 0.0
        %679 = vmatpush1.msra.mxu0 0.0
        %680 = vmatprep.subr.mxu0 0.0
        %681 = vmatpush1.msra.mxu0 0.0
        %682 = vmatprep.subr.mxu0 0.0
        %683 = vmatpush1.msra.mxu0 0.0
        %684 = vmatprep.subr.mxu0 0.0
        %685 = vmatpush1.msra.mxu0 0.0
        %686 = vmatprep.subr.mxu0 0.0
        %687 = vmatpush1.msra.mxu0 0.0
        %688 = vmatprep.subr.mxu0 0.0
        %689 = vmatpush1.msra.mxu0 0.0
        %690 = vmatprep.subr.mxu0 0.0
        %691 = vmatpush1.msra.mxu0 0.0
        %692 = vmatprep.subr.mxu0 0.0
        %693 = vmatpush1.msra.mxu0 0.0
        %694 = vmatprep.subr.mxu0 0.0
        %695 = vmatpush1.msra.mxu0 0.0
        %696 = vmatprep.subr.mxu0 0.0
        %697 = vmatpush1.msra.mxu0 0.0
        %698 = vmatprep.subr.mxu0 0.0
        %699 = vmatpush1.msra.mxu0 0.0
        %700 = vmatprep.subr.mxu0 0.0
        %701 = vmatpush1.msra.mxu0 0.0
        %702 = vmatprep.subr.mxu0 0.0
        %703 = vmatpush1.msra.mxu0 0.0
        %704 = vmatprep.subr.mxu0 0.0
        %705 = vmatpush1.msra.mxu0 0.0
        %706 = vmatprep.subr.mxu0 0.0
        %707 = vmatpush1.msra.mxu0 0.0
        %708 = vmatprep.subr.mxu0 0.0
        %709 = vmatpush1.msra.mxu0 0.0
        %710 = vmatprep.subr.mxu0 0.0
        %711 = vmatpush1.msra.mxu0 0.0
        %712 = vmatprep.subr.mxu0 0.0
        %713 = vmatpush1.msra.mxu0 0.0
        %714 = vmatprep.subr.mxu0 0.0
        %715 = vmatpush1.msra.mxu0 0.0
        %716 = vmatprep.subr.mxu0 0.0
        %717 = vmatpush1.msra.mxu0 0.0
        %718 = vmatprep.subr.mxu0 0.0
        %719 = vmatpush1.msra.mxu0 0.0
        %720 = vmatprep.subr.mxu0 0.0
        %721 = vmatpush1.msra.mxu0 0.0
        %722 = vmatprep.subr.mxu0 0.0
        %723 = vmatpush1.msra.mxu0 0.0
        %724 = vmatprep.subr.mxu0 0.0
        %725 = vmatpush1.msra.mxu0 0.0
        %726 = vmatprep.subr.mxu0 0.0
        %727 = vmatpush1.msra.mxu0 0.0
        %728 = vmatprep.subr.mxu0 0.0
        %729 = vmatpush1.msra.mxu0 0.0
        %730 = vmatprep.mubr.f32.mxu0 0.0
        %731 = vmatmul.mubr.f32.gmra.mrb[0].mxu0 %v661
        %v732 = vpop.f32.mrb[0].mxu0
        %v733 = vadd.f32 0.0, %v732
        %v734 = vpop.f32.mrb[0].mxu0
        %735 = vmatprep.mubr.f32.mxu0 0.0
        %736 = vmatmul.mubr.f32.gmra.mrb[0].mxu0 %v664
        %v737 = vpop.f32.mrb[0].mxu0
        %v738 = vadd.f32 0.0, %v737
        %v739 = vpop.f32.mrb[0].mxu0
        %740 = vdwg.mxu0
        %v741 = vadd.f32 %v639, %v733
        %v742 = vadd.f32 %v644, %v738
        %v743 = vld [vmem:[%s373] sm:$0xff]
        %v744 = vld [vmem:[%s373 + $0x8] sm:$0xff]
        %746 = vset.pattern.permute.xlu0 0
        %747 = vperm.xlu0 %746, %v743
        %v748 = vpop.permute.xlu0 %747
        %751 = vset.pattern.permute.xlu0 0
        %752 = vperm.xlu0 %751, %v744
        %v753 = vpop.permute.xlu0 %752
        %v755 = vadd.f32 %v741, %v748
        %v756 = vadd.f32 %v742, %v753
        %v757 = vld [vmem:[%s5] sm:$0xff]
        %v758 = vld [vmem:[%s5 + $0x8] sm:$0xff]
        %761 = vrot.lane.b32.xlu0 %v755, 1
        %v762 = vpop.permute.xlu0 %761
        %763 = vrot.lane.b32.xlu0 %v756, 1
        %v764 = vpop.permute.xlu0 %763
        %v767 = vsel %vm397, 0.0, %v762
        %v768 = vsel %vm397, 0.0, %v764
        %v769 = vmul.f32 %v767, %v383
        %v770 = vmul.f32 %v768, %v383
        %s771 = scalar_lea.vmem %s5, 16
        %v772 = vld [vmem:[%s771] sm:$0xff]
        %v773 = vld [vmem:[%s771 + $0x8] sm:$0xff]
        %v775 = vsel %vm484, %v772, 0
        %v778 = vsel %vm484, %v773, 0
        %780 = vmatprep.subr.mxu0 0.0
        %781 = vmatpush1.msra.mxu0 %v755
        %782 = vmatprep.subr.mxu0 0.0
        %783 = vmatpush1.msra.mxu0 %v756
        %784 = vmatprep.subr.mxu0 0.0
        %785 = vmatpush1.msra.mxu0 0.0
        %786 = vmatprep.subr.mxu0 0.0
        %787 = vmatpush1.msra.mxu0 0.0
        %788 = vmatprep.subr.mxu0 0.0
        %789 = vmatpush1.msra.mxu0 0.0
        %790 = vmatprep.subr.mxu0 0.0
        %791 = vmatpush1.msra.mxu0 0.0
        %792 = vmatprep.subr.mxu0 0.0
        %793 = vmatpush1.msra.mxu0 0.0
        %794 = vmatprep.subr.mxu0 0.0
        %795 = vmatpush1.msra.mxu0 0.0
        %796 = vmatprep.subr.mxu0 0.0
        %797 = vmatpush1.msra.mxu0 0.0
        %798 = vmatprep.subr.mxu0 0.0
        %799 = vmatpush1.msra.mxu0 0.0
        %800 = vmatprep.subr.mxu0 0.0
        %801 = vmatpush1.msra.mxu0 0.0
        %802 = vmatprep.subr.mxu0 0.0
        %803 = vmatpush1.msra.mxu0 0.0
        %804 = vmatprep.subr.mxu0 0.0
        %805 = vmatpush1.msra.mxu0 0.0
        %806 = vmatprep.subr.mxu0 0.0
        %807 = vmatpush1.msra.mxu0 0.0
        %808 = vmatprep.subr.mxu0 0.0
        %809 = vmatpush1.msra.mxu0 0.0
        %810 = vmatprep.subr.mxu0 0.0
        %811 = vmatpush1.msra.mxu0 0.0
        %812 = vmatprep.subr.mxu0 0.0
        %813 = vmatpush1.msra.mxu0 0.0
        %814 = vmatprep.subr.mxu0 0.0
        %815 = vmatpush1.msra.mxu0 0.0
        %816 = vmatprep.subr.mxu0 0.0
        %817 = vmatpush1.msra.mxu0 0.0
        %818 = vmatprep.subr.mxu0 0.0
        %819 = vmatpush1.msra.mxu0 0.0
        %820 = vmatprep.subr.mxu0 0.0
        %821 = vmatpush1.msra.mxu0 0.0
        %822 = vmatprep.subr.mxu0 0.0
        %823 = vmatpush1.msra.mxu0 0.0
        %824 = vmatprep.subr.mxu0 0.0
        %825 = vmatpush1.msra.mxu0 0.0
        %826 = vmatprep.subr.mxu0 0.0
        %827 = vmatpush1.msra.mxu0 0.0
        %828 = vmatprep.subr.mxu0 0.0
        %829 = vmatpush1.msra.mxu0 0.0
        %830 = vmatprep.subr.mxu0 0.0
        %831 = vmatpush1.msra.mxu0 0.0
        %832 = vmatprep.subr.mxu0 0.0
        %833 = vmatpush1.msra.mxu0 0.0
        %834 = vmatprep.subr.mxu0 0.0
        %835 = vmatpush1.msra.mxu0 0.0
        %836 = vmatprep.subr.mxu0 0.0
        %837 = vmatpush1.msra.mxu0 0.0
        %838 = vmatprep.subr.mxu0 0.0
        %839 = vmatpush1.msra.mxu0 0.0
        %840 = vmatprep.subr.mxu0 0.0
        %841 = vmatpush1.msra.mxu0 0.0
        %842 = vmatprep.subr.mxu0 0.0
        %843 = vmatpush1.msra.mxu0 0.0
        %844 = vmatprep.mubr.f32.mxu0 0.0
        %845 = vmatmul.mubr.f32.gmra.mrb[0].mxu0 %v775
        %v846 = vpop.f32.mrb[0].mxu0
        %v847 = vadd.f32 0.0, %v846
        %v848 = vpop.f32.mrb[0].mxu0
        %849 = vmatprep.mubr.f32.mxu0 0.0
        %850 = vmatmul.mubr.f32.gmra.mrb[0].mxu0 %v778
        %v851 = vpop.f32.mrb[0].mxu0
        %v852 = vadd.f32 0.0, %v851
        %v853 = vpop.f32.mrb[0].mxu0
        %854 = vdwg.mxu0
        %v856 = vsel %vm484, %v757, 0
        %v859 = vsel %vm484, %v758, 0
        %861 = vmatprep.subr.mxu0 0.0
        %862 = vmatpush1.msra.mxu0 %v769
        %863 = vmatprep.subr.mxu0 0.0
        %864 = vmatpush1.msra.mxu0 %v770
        %865 = vmatprep.subr.mxu0 0.0
        %866 = vmatpush1.msra.mxu0 0.0
        %867 = vmatprep.subr.mxu0 0.0
        %868 = vmatpush1.msra.mxu0 0.0
        %869 = vmatprep.subr.mxu0 0.0
        %870 = vmatpush1.msra.mxu0 0.0
        %871 = vmatprep.subr.mxu0 0.0
        %872 = vmatpush1.msra.mxu0 0.0
        %873 = vmatprep.subr.mxu0 0.0
        %874 = vmatpush1.msra.mxu0 0.0
        %875 = vmatprep.subr.mxu0 0.0
        %876 = vmatpush1.msra.mxu0 0.0
        %877 = vmatprep.subr.mxu0 0.0
        %878 = vmatpush1.msra.mxu0 0.0
        %879 = vmatprep.subr.mxu0 0.0
        %880 = vmatpush1.msra.mxu0 0.0
        %881 = vmatprep.subr.mxu0 0.0
        %882 = vmatpush1.msra.mxu0 0.0
        %883 = vmatprep.subr.mxu0 0.0
        %884 = vmatpush1.msra.mxu0 0.0
        %885 = vmatprep.subr.mxu0 0.0
        %886 = vmatpush1.msra.mxu0 0.0
        %887 = vmatprep.subr.mxu0 0.0
        %888 = vmatpush1.msra.mxu0 0.0
        %889 = vmatprep.subr.mxu0 0.0
        %890 = vmatpush1.msra.mxu0 0.0
        %891 = vmatprep.subr.mxu0 0.0
        %892 = vmatpush1.msra.mxu0 0.0
        %893 = vmatprep.subr.mxu0 0.0
        %894 = vmatpush1.msra.mxu0 0.0
        %895 = vmatprep.subr.mxu0 0.0
        %896 = vmatpush1.msra.mxu0 0.0
        %897 = vmatprep.subr.mxu0 0.0
        %898 = vmatpush1.msra.mxu0 0.0
        %899 = vmatprep.subr.mxu0 0.0
        %900 = vmatpush1.msra.mxu0 0.0
        %901 = vmatprep.subr.mxu0 0.0
        %902 = vmatpush1.msra.mxu0 0.0
        %903 = vmatprep.subr.mxu0 0.0
        %904 = vmatpush1.msra.mxu0 0.0
        %905 = vmatprep.subr.mxu0 0.0
        %906 = vmatpush1.msra.mxu0 0.0
        %907 = vmatprep.subr.mxu0 0.0
        %908 = vmatpush1.msra.mxu0 0.0
        %909 = vmatprep.subr.mxu0 0.0
        %910 = vmatpush1.msra.mxu0 0.0
        %911 = vmatprep.subr.mxu0 0.0
        %912 = vmatpush1.msra.mxu0 0.0
        %913 = vmatprep.subr.mxu0 0.0
        %914 = vmatpush1.msra.mxu0 0.0
        %915 = vmatprep.subr.mxu0 0.0
        %916 = vmatpush1.msra.mxu0 0.0
        %917 = vmatprep.subr.mxu0 0.0
        %918 = vmatpush1.msra.mxu0 0.0
        %919 = vmatprep.subr.mxu0 0.0
        %920 = vmatpush1.msra.mxu0 0.0
        %921 = vmatprep.subr.mxu0 0.0
        %922 = vmatpush1.msra.mxu0 0.0
        %923 = vmatprep.subr.mxu0 0.0
        %924 = vmatpush1.msra.mxu0 0.0
        %925 = vmatprep.mubr.f32.mxu0 0.0
        %926 = vmatmul.mubr.f32.gmra.mrb[0].mxu0 %v856
        %v927 = vpop.f32.mrb[0].mxu0
        %v928 = vadd.f32 %v847, %v927
        %v929 = vpop.f32.mrb[0].mxu0
        %930 = vmatprep.mubr.f32.mxu0 0.0
        %931 = vmatmul.mubr.f32.gmra.mrb[0].mxu0 %v859
        %v932 = vpop.f32.mrb[0].mxu0
        %v933 = vadd.f32 %v852, %v932
        %v934 = vpop.f32.mrb[0].mxu0
        %935 = vdwg.mxu0
        %s936 = scalar_lea.vmem %s5, 32
        %v937 = vld [vmem:[%s936] sm:$0xff]
        %v938 = vld [vmem:[%s936 + $0x8] sm:$0xff]
        %939 = vrot.lane.b32.xlu0 %v755, 127
        %v940 = vpop.permute.xlu0 %939
        %941 = vrot.lane.b32.xlu0 %v756, 127
        %v942 = vpop.permute.xlu0 %941
        %v945 = vsel %vm432, %v940, 0.0
        %v946 = vsel %vm432, %v942, 0.0
        %v947 = vmul.f32 %v945, %v386
        %v948 = vmul.f32 %v946, %v386
        %v950 = vsel %vm484, %v937, 0
        %v953 = vsel %vm484, %v938, 0
        %955 = vmatprep.subr.mxu0 0.0
        %956 = vmatpush1.msra.mxu0 %v947
        %957 = vmatprep.subr.mxu0 0.0
        %958 = vmatpush1.msra.mxu0 %v948
        %959 = vmatprep.subr.mxu0 0.0
        %960 = vmatpush1.msra.mxu0 0.0
        %961 = vmatprep.subr.mxu0 0.0
        %962 = vmatpush1.msra.mxu0 0.0
        %963 = vmatprep.subr.mxu0 0.0
        %964 = vmatpush1.msra.mxu0 0.0
        %965 = vmatprep.subr.mxu0 0.0
        %966 = vmatpush1.msra.mxu0 0.0
        %967 = vmatprep.subr.mxu0 0.0
        %968 = vmatpush1.msra.mxu0 0.0
        %969 = vmatprep.subr.mxu0 0.0
        %970 = vmatpush1.msra.mxu0 0.0
        %971 = vmatprep.subr.mxu0 0.0
        %972 = vmatpush1.msra.mxu0 0.0
        %973 = vmatprep.subr.mxu0 0.0
        %974 = vmatpush1.msra.mxu0 0.0
        %975 = vmatprep.subr.mxu0 0.0
        %976 = vmatpush1.msra.mxu0 0.0
        %977 = vmatprep.subr.mxu0 0.0
        %978 = vmatpush1.msra.mxu0 0.0
        %979 = vmatprep.subr.mxu0 0.0
        %980 = vmatpush1.msra.mxu0 0.0
        %981 = vmatprep.subr.mxu0 0.0
        %982 = vmatpush1.msra.mxu0 0.0
        %983 = vmatprep.subr.mxu0 0.0
        %984 = vmatpush1.msra.mxu0 0.0
        %985 = vmatprep.subr.mxu0 0.0
        %986 = vmatpush1.msra.mxu0 0.0
        %987 = vmatprep.subr.mxu0 0.0
        %988 = vmatpush1.msra.mxu0 0.0
        %989 = vmatprep.subr.mxu0 0.0
        %990 = vmatpush1.msra.mxu0 0.0
        %991 = vmatprep.subr.mxu0 0.0
        %992 = vmatpush1.msra.mxu0 0.0
        %993 = vmatprep.subr.mxu0 0.0
        %994 = vmatpush1.msra.mxu0 0.0
        %995 = vmatprep.subr.mxu0 0.0
        %996 = vmatpush1.msra.mxu0 0.0
        %997 = vmatprep.subr.mxu0 0.0
        %998 = vmatpush1.msra.mxu0 0.0
        %999 = vmatprep.subr.mxu0 0.0
        %1000 = vmatpush1.msra.mxu0 0.0
        %1001 = vmatprep.subr.mxu0 0.0
        %1002 = vmatpush1.msra.mxu0 0.0
        %1003 = vmatprep.subr.mxu0 0.0
        %1004 = vmatpush1.msra.mxu0 0.0
        %1005 = vmatprep.subr.mxu0 0.0
        %1006 = vmatpush1.msra.mxu0 0.0
        %1007 = vmatprep.subr.mxu0 0.0
        %1008 = vmatpush1.msra.mxu0 0.0
        %1009 = vmatprep.subr.mxu0 0.0
        %1010 = vmatpush1.msra.mxu0 0.0
        %1011 = vmatprep.subr.mxu0 0.0
        %1012 = vmatpush1.msra.mxu0 0.0
        %1013 = vmatprep.subr.mxu0 0.0
        %1014 = vmatpush1.msra.mxu0 0.0
        %1015 = vmatprep.subr.mxu0 0.0
        %1016 = vmatpush1.msra.mxu0 0.0
        %1017 = vmatprep.subr.mxu0 0.0
        %1018 = vmatpush1.msra.mxu0 0.0
        %1019 = vmatprep.mubr.f32.mxu0 0.0
        %1020 = vmatmul.mubr.f32.gmra.mrb[0].mxu0 %v950
        %v1021 = vpop.f32.mrb[0].mxu0
        %v1022 = vadd.f32 0.0, %v1021
        %v1023 = vpop.f32.mrb[0].mxu0
        %1024 = vmatprep.mubr.f32.mxu0 0.0
        %1025 = vmatmul.mubr.f32.gmra.mrb[0].mxu0 %v953
        %v1026 = vpop.f32.mrb[0].mxu0
        %v1027 = vadd.f32 0.0, %v1026
        %v1028 = vpop.f32.mrb[0].mxu0
        %1029 = vdwg.mxu0
        %v1030 = vadd.f32 %v928, %v1022
        %v1031 = vadd.f32 %v933, %v1027
        %v1032 = vld [vmem:[%s6] sm:$0xff]
        %v1033 = vld [vmem:[%s6 + $0x8] sm:$0xff]
        %1035 = vset.pattern.permute.xlu0 0
        %1036 = vperm.xlu0 %1035, %v1032
        %v1037 = vpop.permute.xlu0 %1036
        %1040 = vset.pattern.permute.xlu0 0
        %1041 = vperm.xlu0 %1040, %v1033
        %v1042 = vpop.permute.xlu0 %1041
        %v1044 = vadd.f32 %v1030, %v1037
        %v1045 = vadd.f32 %v1031, %v1042
        %v1046 = vmax.f32 %v1044, 0.0
        %v1047 = vmax.f32 %v1045, 0.0
        %v1048 = vld [vmem:[%s7] sm:$0xff]
        %v1049 = vld [vmem:[%s7 + $0x8] sm:$0xff]
        %1052 = vrot.lane.b32.xlu0 %v1046, 1
        %v1053 = vpop.permute.xlu0 %1052
        %1054 = vrot.lane.b32.xlu0 %v1047, 1
        %v1055 = vpop.permute.xlu0 %1054
        %v1058 = vsel %vm397, 0.0, %v1053
        %v1059 = vsel %vm397, 0.0, %v1055
        %v1060 = vmul.f32 %v1058, %v383
        %v1061 = vmul.f32 %v1059, %v383
        %1063 = vset.pattern.permute.xlu0 0
        %1064 = vperm.xlu0 %1063, %v1048
        %v1065 = vpop.permute.xlu0 %1064
        %1068 = vset.pattern.permute.xlu0 0
        %1069 = vperm.xlu0 %1068, %v1049
        %v1070 = vpop.permute.xlu0 %1069
        %v1072 = vmul.f32 %v1065, %v1060
        %v1073 = vmul.f32 %v1070, %v1061
        %1074 = vset.pattern.permute.xlu0 1
        %1075 = vperm.xlu0 %1074, %v1048
        %v1076 = vpop.permute.xlu0 %1075
        %1078 = vset.pattern.permute.xlu0 1
        %1079 = vperm.xlu0 %1078, %v1049
        %v1080 = vpop.permute.xlu0 %1079
        %v1082 = vmul.f32 %v1076, %v1046
        %v1083 = vmul.f32 %v1080, %v1047
        %v1084 = vadd.f32 %v1072, %v1082
        %v1085 = vadd.f32 %v1073, %v1083
        %1086 = vrot.lane.b32.xlu0 %v1046, 127
        %v1087 = vpop.permute.xlu0 %1086
        %1088 = vrot.lane.b32.xlu0 %v1047, 127
        %v1089 = vpop.permute.xlu0 %1088
        %v1092 = vsel %vm432, %v1087, 0.0
        %v1093 = vsel %vm432, %v1089, 0.0
        %v1094 = vmul.f32 %v1092, %v386
        %v1095 = vmul.f32 %v1093, %v386
        %1096 = vset.pattern.permute.xlu0 2
        %1097 = vperm.xlu0 %1096, %v1048
        %v1098 = vpop.permute.xlu0 %1097
        %1100 = vset.pattern.permute.xlu0 2
        %1101 = vperm.xlu0 %1100, %v1049
        %v1102 = vpop.permute.xlu0 %1101
        %v1104 = vmul.f32 %v1098, %v1094
        %v1105 = vmul.f32 %v1102, %v1095
        %v1106 = vadd.f32 %v1084, %v1104
        %v1107 = vadd.f32 %v1085, %v1105
        %v1108 = vadd.f32 %v1106, %v1107
        %v1109 = vrot.slane %v1108, 4
        %v1110 = vadd.f32 %v1108, %v1109
        %v1111 = vrot.slane %v1110, 2
        %v1112 = vadd.f32 %v1110, %v1111
        %v1113 = vrot.slane %v1112, 1
        %v1114 = vadd.f32 %v1112, %v1113
        %v1115 = vld [vmem:[#allocation2] sm:$0x1]
        %1117 = vset.pattern.permute.xlu0 0
        %1118 = vperm.xlu0 %1117, %v1115
        %v1119 = vpop.permute.xlu0 %1118
        %v1121 = vlaneseq
        %v1122 = vshrl.u32 %v1121, 7
        %v1123 = vsub.s32 0, %v1122
        %v1124 = vrot.slane %v1119, %v1123
        %v1125 = vadd.f32 %v1114, %v1124
        %v1126 = vadd.f32 %v374, %v1125
        %v1128 = vlaneseq
        %v1129 = vshrl.u32 %v1128, 7
        %v1130 = vsub.s32 0, %v1129
        %v1131 = vrot.slane %v1126, %v1130
        %1132 = vrot.lane.b32.xlu0 %v1131, 124
        %v1133 = vpop.permute.xlu0 %1132
        %vm1135 = vcmask 974848
        %1136 = vst.msk [vmem:[%s361] sm:$0x1] %vm1135, %v1133
        %s1137 = sand.u32 %s248, 1
        %s1138 = scalar_lea.sflag [#allocation4], %s1137
        %s1139 = sand.u32 %s248, 1
        %s1140 = scalar_lea.vmem [#allocation3], %s1139
        // Predicated region
        $region57: #{tpu_custom_call.1} parent=55 // pred_check
          %p1141 = pneg %p258
        $region58: #{tpu_custom_call.1} parent=55 // pred_check_branch
          %1143 = sbr.rel (%p1141) target = $region60
        $region59: #{tpu_custom_call.1} parent=55 // pred_region
          %s1145 = ssub.s32 16, 16
          %1146 = vsyncadd %s1138, %s1145
          %s1147 = smul.addr %s29, 2
          %s1148 = sadd.s32 %s30, %s1147
          %s1149 = smul.addr %s1148, 16
          %s1150 = scalar_lea.hbm %s9, %s1149
          %s1152 = sshll.u32 %s1140, 4
          %s1153 = int_to_ptr.vmem [resolvable:$true] %s1152
          %1155 = dma.vmem_to_hbm [thread:$0]  %s1153, 16, %s1150, %s1138
        $region60: #{tpu_custom_call.1} parent=55 // pred_fallthru
          _
      $region56: #{tpu_custom_call.1} parent=5 // pred_fallthru
        _
      %p1156 = scmp.le.s32.totalorder 2, %s20
      // Predicated region
      $region61: #{tpu_custom_call.1} parent=5 // pred_check
        %p1157 = pneg %p1156
      $region62: #{tpu_custom_call.1} parent=5 // pred_check_branch
        %1159 = sbr.rel (%p1157) target = $region64
      $region63: #{tpu_custom_call.1} parent=5 // pred_region
        %s1160 = ssub.s32 %s20, 2
        // Predicated region
        $region65: #{tpu_custom_call.1} parent=63 // pred_check
          %p1161 = pneg %p264
        $region66: #{tpu_custom_call.1} parent=63 // pred_check_branch
          %1163 = sbr.rel (%p1161) target = $region68
        $region67: #{tpu_custom_call.1} parent=63 // pred_region
          %s1164 = sand.u32 %s249, 1
          %s1165 = scalar_lea.sflag [#allocation4], %s1164
          %s1166 = sand.u32 %s249, 1
          %s1167 = scalar_lea.vmem [#allocation3], %s1166
          %1168 = dma.done %s1165, 16
        $region68: #{tpu_custom_call.1} parent=63 // pred_fallthru
          _
      $region64: #{tpu_custom_call.1} parent=5 // pred_fallthru
        _
    $region6: #{tpu_custom_call.1} parent=1 // loop_footer
      %s24 = sadd.s32 1, %s20
    $region7: #{tpu_custom_call.1} parent=1 // loop_footer_branch
      %19 = sbr.rel target = $region3
    $region8: #{tpu_custom_call.1} parent=1 // loop_exit
      _
    %1169 = vsyncpa [#allocation4], 1
    %s1170 = scalar_lea.sflag [#allocation4], 1
    %1171 = vsyncpa %s1170, 1

</llo_original>
